<compile_context>
chip_gen: v5e
topology: v5e:2x2
jax: 0.10.0
libtpu: 0.0.40
codegen_flags: <defaults>
</compile_context>

<pallas_src>
import functools

import jax
import jax.numpy as jnp
from jax.experimental import pallas as pl
from jax.experimental.pallas import tpu as pltpu

NUM_CLASSES = 10
IN_FEATURES = 512
LANE = 128          # vreg lane width: pad the class dim to this
SUBLANE = 8         # vreg sublane width: pad batch to a multiple of this
MAX_TILE_B = 1024   # safe for v7x's smaller VMEM (double-buffered bf16 x blocks)


def _round_up(x, m):
    return (x + m - 1) // m * m


def _linear_kernel(x_ref, w_ref, b_ref, o_ref):
    # x (TILE_B, K) bf16, w (K, N_PAD) bf16, b (1, N_PAD) f32, o (TILE_B, N_PAD) f32.
    # MXU matmul with f32 accumulation, broadcasted bias add on the VPU.
    acc = jnp.dot(x_ref[...], w_ref[...], preferred_element_type=jnp.float32)
    o_ref[...] = (acc + b_ref[...]).astype(o_ref.dtype)


@functools.partial(jax.jit, static_argnames=("num_classes",))
def linear_pallas(x_flat, w, b, num_classes=NUM_CLASSES):
    """x_flat: (B, K) f32, w: (K, N) f32, b: (1, N) f32 -> (B, N) f32 logits."""
    B, K = x_flat.shape
    N = w.shape[1]

    # --- lane-dense padding of the class dimension (zero pad so padded
    #     columns stay exactly 0 and can never leak downstream).
    n_pad = _round_up(N, LANE)
    w_p = jnp.zeros((K, n_pad), jnp.float32).at[:, :N].set(w)
    b_p = jnp.zeros((1, n_pad), jnp.float32).at[:, :N].set(b)

    # --- batch padding / tiling.
    b_pad = _round_up(max(B, SUBLANE), SUBLANE)
    tile_b = min(MAX_TILE_B, b_pad)
    b_pad = _round_up(b_pad, tile_b)
    x_p = jnp.zeros((b_pad, K), jnp.float32).at[:B, :].set(x_flat)

    # bf16 operands, f32 accumulation (native MXU rate on v6e/v7x).
    x_bf = x_p.astype(jnp.bfloat16)
    w_bf = w_p.astype(jnp.bfloat16)

    grid = (b_pad // tile_b,)
    out = pl.pallas_call(
        _linear_kernel,
        out_shape=jax.ShapeDtypeStruct((b_pad, n_pad), jnp.float32),
        grid=grid,
        in_specs=[
            pl.BlockSpec((tile_b, K), lambda i: (i, 0)),   # x: tiled over batch
            pl.BlockSpec((K, n_pad), lambda i: (0, 0)),    # W: VMEM-resident
            pl.BlockSpec((1, n_pad), lambda i: (0, 0)),    # b: VMEM-resident
        ],
        out_specs=pl.BlockSpec((tile_b, n_pad), lambda i: (i, 0)),
        compiler_params=pltpu.CompilerParams(
            dimension_semantics=("parallel",),  # shard batch across TCs on v7x
        ),
        cost_estimate=pl.CostEstimate(
            flops=2 * b_pad * K * n_pad,
            transcendentals=0,
            bytes_accessed=(b_pad * K * 2 + K * n_pad * 2
                            + n_pad * 4 + b_pad * n_pad * 4),
        ),
    )(x_bf, w_bf, b_p)

    return out[:B, :N]


def vgg16_single_fc_later_part(x, w, b):
    """Forward pass matching the PyTorch module.

    x: (B, C, H, W) NCHW with C*H*W == 512 (here (B, 512, 1, 1)).
    Returns logits (B, num_classes).
    """
    B = x.shape[0]
    x_flat = x.reshape(B, -1).astype(jnp.float32)  # glue: x.view(B, -1)
    return linear_pallas(x_flat, w, b, num_classes=w.shape[1])


def init_params(key, in_features=IN_FEATURES, num_classes=NUM_CLASSES):
    # Deterministic init mimicking nn.Linear defaults (uniform +/- 1/sqrt(fan_in)).
    kw, kb = jax.random.split(key)
    bound = 1.0 / jnp.sqrt(jnp.float32(in_features))
    # PyTorch stores weight as (out, in); we keep (in, out) for x @ W.
    w = jax.random.uniform(kw, (in_features, num_classes), jnp.float32,
                           minval=-bound, maxval=bound)
    b = jax.random.uniform(kb, (1, num_classes), jnp.float32,
                           minval=-bound, maxval=bound)
    return w, b


if __name__ == "__main__":
    key = jax.random.PRNGKey(0)
    kx, kp = jax.random.split(key)

    # Small shapes consistent with the module: batch=2, features 512x1x1 (NCHW).
    B = 2
    x = jax.random.normal(kx, (B, IN_FEATURES, 1, 1), jnp.float32)
    w, b = init_params(kp)

    out = vgg16_single_fc_later_part(x, w, b)
    out = jax.block_until_ready(out)
    assert out.shape == (B, NUM_CLASSES)

    # Reference with the same bf16 operand cast + f32 accumulation (tight check).
    x_flat = x.reshape(B, -1)
    ref_bf16 = jnp.dot(x_flat.astype(jnp.bfloat16).astype(jnp.float32),
                       w.astype(jnp.bfloat16).astype(jnp.float32)) + b
    assert jnp.allclose(out, ref_bf16, atol=2e-3, rtol=2e-3)

    # Loose check against the full-f32 reference (bf16 operand rounding only).
    ref_f32 = x_flat @ w + b
    assert jnp.allclose(out, ref_f32, atol=5e-2, rtol=5e-2)

    print("KERNEL_OK")
</pallas_src>

<mosaic_0001>
module attributes {stable_mosaic.version = 11 : i64} {
  func.func @_linear_kernel(%arg0: i32, %arg1: memref<8x512xbf16, #tpu.memory_space<vmem>>, %arg2: memref<512x128xbf16, #tpu.memory_space<vmem>>, %arg3: memref<1x128xf32, #tpu.memory_space<vmem>>, %arg4: memref<8x128xf32, #tpu.memory_space<vmem>>) attributes {dimension_semantics = [#tpu.dimension_semantics<parallel>], iteration_bounds = array<i64: 1>, scalar_prefetch = 0 : i64, scratch_operands = 0 : i64, tpu.core_type = #tpu.core_type<tc>, window_params = [{transform_indices = @transform_0, window_bounds = array<i64: 8, 512>}, {pipeline_mode = #tpu.pipeline_mode<synchronous>, transform_indices = @transform_1, window_bounds = array<i64: 512, 128>}, {pipeline_mode = #tpu.pipeline_mode<synchronous>, transform_indices = @transform_2, window_bounds = array<i64: 1, 128>}, {transform_indices = @transform_3, window_bounds = array<i64: 8, 128>}]} {
    %c0 = arith.constant 0 : index
    %c0_0 = arith.constant 0 : index
    %0 = vector.load %arg1[%c0, %c0_0] : memref<8x512xbf16, #tpu.memory_space<vmem>>, vector<8x512xbf16>
    %c0_1 = arith.constant 0 : index
    %c0_2 = arith.constant 0 : index
    %1 = vector.load %arg2[%c0_1, %c0_2] : memref<512x128xbf16, #tpu.memory_space<vmem>>, vector<512x128xbf16>
    %cst = arith.constant dense<0.000000e+00> : vector<8x128xf32>
    %2 = tpu.matmul %0, %1, %cst {dimension_numbers = #tpu.dot_dimension_numbers<[1], [0], [0], [1], [0, 0, 1, 1], [], []>} : vector<8x512xbf16>, vector<512x128xbf16>, vector<8x128xf32> -> vector<8x128xf32>
    %c0_3 = arith.constant 0 : index
    %c0_4 = arith.constant 0 : index
    %3 = vector.load %arg3[%c0_3, %c0_4] : memref<1x128xf32, #tpu.memory_space<vmem>>, vector<1x128xf32>
    %4 = vector.broadcast %3 : vector<1x128xf32> to vector<8x128xf32>
    %5 = arith.addf %2, %4 : vector<8x128xf32>
    %c0_5 = arith.constant 0 : index
    %c0_6 = arith.constant 0 : index
    %6 = vector.load %arg4[%c0_5, %c0_6] : memref<8x128xf32, #tpu.memory_space<vmem>>, vector<8x128xf32>
    tpu.vector_store %arg4[%c0_5, %c0_6], %5 {strides = array<i32>} : memref<8x128xf32, #tpu.memory_space<vmem>>, vector<8x128xf32>,
    return
  }
  func.func @transform_0(%arg0: i32) -> (i32, i32) {
    %c0_i32 = arith.constant 0 : i32
    %c0_i32_0 = arith.constant 0 : i32
    return %arg0, %c0_i32 : i32, i32
  }
  func.func @transform_1(%arg0: i32) -> (i32, i32) {
    %c0_i32 = arith.constant 0 : i32
    %c0_i32_0 = arith.constant 0 : i32
    %c0_i32_1 = arith.constant 0 : i32
    return %c0_i32, %c0_i32_0 : i32, i32
  }
  func.func @transform_2(%arg0: i32) -> (i32, i32) {
    %c0_i32 = arith.constant 0 : i32
    %c0_i32_0 = arith.constant 0 : i32
    %c0_i32_1 = arith.constant 0 : i32
    return %c0_i32, %c0_i32_0 : i32, i32
  }
  func.func @transform_3(%arg0: i32) -> (i32, i32) {
    %c0_i32 = arith.constant 0 : i32
    %c0_i32_0 = arith.constant 0 : i32
    return %arg0, %c0_i32 : i32, i32
  }
}

</mosaic_0001>

<llo_original>
// kernel: linear_pallas.1
$region0: #{linear_pallas.1}
  #allocation0 [shape = 'u32[]', space=smem, size = 0x4, offset = 0x4, fixed_abs, tag = 'smem constant byte address 0x4 - core index']
  #allocation1 [shape = 'u32[72,128]{1,0:T(1,128)}', space=vmem, size = 0x9000, scoped, tag = 'internal scratch']
  %s0 = inlined_call_operand.vmem [shape: bf16[8,512], index: 0, kind: input, shape index: {}]
  %s1 = inlined_call_operand.vmem [shape: bf16[512,128], index: 1, kind: input, shape index: {}]
  %s2 = inlined_call_operand.vmem [shape: f32[1,128], index: 2, kind: input, shape index: {}]
  %s3 = inlined_call_operand.vmem [shape: f32[8,128], index: 3, kind: output, shape index: {}]
  %s4 = sld [smem:[#allocation0]]
  $region22: #{linear_pallas.1} parent=0
    _
  %s6 = ssub.s32 1, %s4
  %s7 = scalar_select 0, %s6, %s4
  // Predicated region
  $region2: #{linear_pallas.1} parent=0 // pred_check
    _
  $region3: #{linear_pallas.1} parent=0 // pred_check_branch
    %9 = sbr.rel (0) target = $region5
  $region4: #{linear_pallas.1} parent=0 // pred_region
    _
  $region5: #{linear_pallas.1} parent=0 // pred_fallthru
    _
  // Predicated region
  $region6: #{linear_pallas.1} parent=0 // pred_check
    _
  $region7: #{linear_pallas.1} parent=0 // pred_check_branch
    %11 = sbr.rel (0) target = $region9
  $region8: #{linear_pallas.1} parent=0 // pred_region
    _
  $region9: #{linear_pallas.1} parent=0 // pred_fallthru
    _
  // Predicated region
  $region10: #{linear_pallas.1} parent=0 // pred_check
    _
  $region11: #{linear_pallas.1} parent=0 // pred_check_branch
    %13 = sbr.rel (0) target = $region13
  $region12: #{linear_pallas.1} parent=0 // pred_region
    _
  $region13: #{linear_pallas.1} parent=0 // pred_fallthru
    _
  %v14 = vld [vmem:[%s0] sm:$0xff]
  %v15 = vld [vmem:[%s0 + $0x8] sm:$0xff]
  %v16 = vld [vmem:[%s1] sm:$0xf]
  %v17 = vld [vmem:[%s1 + $0x4] sm:$0xf]
  %v18 = vld [vmem:[%s1 + $0x8] sm:$0xf]
  %v19 = vld [vmem:[%s1 + $0xc] sm:$0xf]
  %v20 = vld [vmem:[%s1 + $0x10] sm:$0xf]
  %v21 = vld [vmem:[%s1 + $0x14] sm:$0xf]
  %v22 = vld [vmem:[%s1 + $0x18] sm:$0xf]
  %v23 = vld [vmem:[%s1 + $0x1c] sm:$0xf]
  %v24 = vld [vmem:[%s1 + $0x20] sm:$0xf]
  %v25 = vld [vmem:[%s1 + $0x24] sm:$0xf]
  %v26 = vld [vmem:[%s1 + $0x28] sm:$0xf]
  %v27 = vld [vmem:[%s1 + $0x2c] sm:$0xf]
  %v28 = vld [vmem:[%s1 + $0x30] sm:$0xf]
  %v29 = vld [vmem:[%s1 + $0x34] sm:$0xf]
  %v30 = vld [vmem:[%s1 + $0x38] sm:$0xf]
  %v31 = vld [vmem:[%s1 + $0x3c] sm:$0xf]
  %v32 = vld [vmem:[%s1 + $0x40] sm:$0xf]
  %v33 = vld [vmem:[%s1 + $0x44] sm:$0xf]
  %v34 = vld [vmem:[%s1 + $0x48] sm:$0xf]
  %v35 = vld [vmem:[%s1 + $0x4c] sm:$0xf]
  %v36 = vld [vmem:[%s1 + $0x50] sm:$0xf]
  %v37 = vld [vmem:[%s1 + $0x54] sm:$0xf]
  %v38 = vld [vmem:[%s1 + $0x58] sm:$0xf]
  %v39 = vld [vmem:[%s1 + $0x5c] sm:$0xf]
  %v40 = vld [vmem:[%s1 + $0x60] sm:$0xf]
  %v41 = vld [vmem:[%s1 + $0x64] sm:$0xf]
  %v42 = vld [vmem:[%s1 + $0x68] sm:$0xf]
  %v43 = vld [vmem:[%s1 + $0x6c] sm:$0xf]
  %v44 = vld [vmem:[%s1 + $0x70] sm:$0xf]
  %v45 = vld [vmem:[%s1 + $0x74] sm:$0xf]
  %v46 = vld [vmem:[%s1 + $0x78] sm:$0xf]
  %v47 = vld [vmem:[%s1 + $0x7c] sm:$0xf]
  %v48 = vld [vmem:[%s1 + $0x80] sm:$0xf]
  %v49 = vld [vmem:[%s1 + $0x84] sm:$0xf]
  %v50 = vld [vmem:[%s1 + $0x88] sm:$0xf]
  %v51 = vld [vmem:[%s1 + $0x8c] sm:$0xf]
  %v52 = vld [vmem:[%s1 + $0x90] sm:$0xf]
  %v53 = vld [vmem:[%s1 + $0x94] sm:$0xf]
  %v54 = vld [vmem:[%s1 + $0x98] sm:$0xf]
  %v55 = vld [vmem:[%s1 + $0x9c] sm:$0xf]
  %v56 = vld [vmem:[%s1 + $0xa0] sm:$0xf]
  %v57 = vld [vmem:[%s1 + $0xa4] sm:$0xf]
  %v58 = vld [vmem:[%s1 + $0xa8] sm:$0xf]
  %v59 = vld [vmem:[%s1 + $0xac] sm:$0xf]
  %v60 = vld [vmem:[%s1 + $0xb0] sm:$0xf]
  %v61 = vld [vmem:[%s1 + $0xb4] sm:$0xf]
  %v62 = vld [vmem:[%s1 + $0xb8] sm:$0xf]
  %v63 = vld [vmem:[%s1 + $0xbc] sm:$0xf]
  %v64 = vld [vmem:[%s1 + $0xc0] sm:$0xf]
  %v65 = vld [vmem:[%s1 + $0xc4] sm:$0xf]
  %v66 = vld [vmem:[%s1 + $0xc8] sm:$0xf]
  %v67 = vld [vmem:[%s1 + $0xcc] sm:$0xf]
  %v68 = vld [vmem:[%s1 + $0xd0] sm:$0xf]
  %v69 = vld [vmem:[%s1 + $0xd4] sm:$0xf]
  %v70 = vld [vmem:[%s1 + $0xd8] sm:$0xf]
  %v71 = vld [vmem:[%s1 + $0xdc] sm:$0xf]
  %v72 = vld [vmem:[%s1 + $0xe0] sm:$0xf]
  %v73 = vld [vmem:[%s1 + $0xe4] sm:$0xf]
  %v74 = vld [vmem:[%s1 + $0xe8] sm:$0xf]
  %v75 = vld [vmem:[%s1 + $0xec] sm:$0xf]
  %v76 = vld [vmem:[%s1 + $0xf0] sm:$0xf]
  %v77 = vld [vmem:[%s1 + $0xf4] sm:$0xf]
  %v78 = vld [vmem:[%s1 + $0xf8] sm:$0xf]
  %v79 = vld [vmem:[%s1 + $0xfc] sm:$0xf]
  %v80 = vld [vmem:[%s2] sm:$0x1]
  %v82 = vperm.slane %v80, 0
  %v86 = vunpack.c.l.b16 %v14
  %v87 = vunpack.c.h.b16 %v14
  %v88 = vunpack.c.l.b16 %v15
  %v89 = vunpack.c.h.b16 %v15
  %v90 = vpack.c.b16 %v86, %v86
  %v91 = vpack.c.b16 %v87, %v87
  %v92 = vpack.c.b16 %v88, %v88
  %v93 = vpack.c.b16 %v89, %v89
  %v162 = vunpack.c.l.b16 %v16
  %v163 = vunpack.c.l.b16 %v17
  %v164 = vunpack.c.l.b16 %v18
  %v165 = vunpack.c.l.b16 %v19
  %v166 = vunpack.c.l.b16 %v20
  %v167 = vunpack.c.l.b16 %v21
  %v168 = vunpack.c.l.b16 %v22
  %v169 = vunpack.c.l.b16 %v23
  %v170 = vunpack.c.l.b16 %v24
  %v171 = vunpack.c.l.b16 %v25
  %v172 = vunpack.c.l.b16 %v26
  %v173 = vunpack.c.l.b16 %v27
  %v174 = vunpack.c.l.b16 %v28
  %v175 = vunpack.c.l.b16 %v29
  %v176 = vunpack.c.l.b16 %v30
  %v177 = vunpack.c.l.b16 %v31
  %v178 = vunpack.c.l.b16 %v32
  %v179 = vunpack.c.l.b16 %v33
  %v180 = vunpack.c.l.b16 %v34
  %v181 = vunpack.c.l.b16 %v35
  %v182 = vunpack.c.l.b16 %v36
  %v183 = vunpack.c.l.b16 %v37
  %v184 = vunpack.c.l.b16 %v38
  %v185 = vunpack.c.l.b16 %v39
  %v186 = vunpack.c.l.b16 %v40
  %v187 = vunpack.c.l.b16 %v41
  %v188 = vunpack.c.l.b16 %v42
  %v189 = vunpack.c.l.b16 %v43
  %v190 = vunpack.c.l.b16 %v44
  %v191 = vunpack.c.l.b16 %v45
  %v192 = vunpack.c.l.b16 %v46
  %v193 = vunpack.c.l.b16 %v47
  %v194 = vunpack.c.l.b16 %v48
  %v195 = vunpack.c.l.b16 %v49
  %v196 = vunpack.c.l.b16 %v50
  %v197 = vunpack.c.l.b16 %v51
  %v198 = vunpack.c.l.b16 %v52
  %v199 = vunpack.c.l.b16 %v53
  %v200 = vunpack.c.l.b16 %v54
  %v201 = vunpack.c.l.b16 %v55
  %v202 = vunpack.c.l.b16 %v56
  %v203 = vunpack.c.l.b16 %v57
  %v204 = vunpack.c.l.b16 %v58
  %v205 = vunpack.c.l.b16 %v59
  %v206 = vunpack.c.l.b16 %v60
  %v207 = vunpack.c.l.b16 %v61
  %v208 = vunpack.c.l.b16 %v62
  %v209 = vunpack.c.l.b16 %v63
  %v210 = vunpack.c.l.b16 %v64
  %v211 = vunpack.c.l.b16 %v65
  %v212 = vunpack.c.l.b16 %v66
  %v213 = vunpack.c.l.b16 %v67
  %v214 = vunpack.c.l.b16 %v68
  %v215 = vunpack.c.l.b16 %v69
  %v216 = vunpack.c.l.b16 %v70
  %v217 = vunpack.c.l.b16 %v71
  %v218 = vunpack.c.l.b16 %v72
  %v219 = vunpack.c.l.b16 %v73
  %v220 = vunpack.c.l.b16 %v74
  %v221 = vunpack.c.l.b16 %v75
  %v222 = vunpack.c.l.b16 %v76
  %v223 = vunpack.c.l.b16 %v77
  %v224 = vunpack.c.l.b16 %v78
  %v225 = vunpack.c.l.b16 %v79
  %v226 = vpack.c.b16 %v163, %v162
  %v227 = vpack.c.b16 %v165, %v164
  %v228 = vpack.c.b16 %v167, %v166
  %v229 = vpack.c.b16 %v169, %v168
  %v230 = vpack.c.b16 %v171, %v170
  %v231 = vpack.c.b16 %v173, %v172
  %v232 = vpack.c.b16 %v175, %v174
  %v233 = vpack.c.b16 %v177, %v176
  %v234 = vpack.c.b16 %v179, %v178
  %v235 = vpack.c.b16 %v181, %v180
  %v236 = vpack.c.b16 %v183, %v182
  %v237 = vpack.c.b16 %v185, %v184
  %v238 = vpack.c.b16 %v187, %v186
  %v239 = vpack.c.b16 %v189, %v188
  %v240 = vpack.c.b16 %v191, %v190
  %v241 = vpack.c.b16 %v193, %v192
  %v242 = vpack.c.b16 %v195, %v194
  %v243 = vpack.c.b16 %v197, %v196
  %v244 = vpack.c.b16 %v199, %v198
  %v245 = vpack.c.b16 %v201, %v200
  %v246 = vpack.c.b16 %v203, %v202
  %v247 = vpack.c.b16 %v205, %v204
  %v248 = vpack.c.b16 %v207, %v206
  %v249 = vpack.c.b16 %v209, %v208
  %v250 = vpack.c.b16 %v211, %v210
  %v251 = vpack.c.b16 %v213, %v212
  %v252 = vpack.c.b16 %v215, %v214
  %v253 = vpack.c.b16 %v217, %v216
  %v254 = vpack.c.b16 %v219, %v218
  %v255 = vpack.c.b16 %v221, %v220
  %v256 = vpack.c.b16 %v223, %v222
  %v257 = vpack.c.b16 %v225, %v224
  %290 = vmatpush.bf16.msra.mxu0 %v233
  %291 = vmatpush.bf16.msra.mxu0 %v232
  %292 = vmatpush.bf16.msra.mxu0 %v231
  %293 = vmatpush.bf16.msra.mxu0 %v230
  %294 = vmatpush.bf16.msra.mxu0 %v229
  %295 = vmatpush.bf16.msra.mxu0 %v228
  %296 = vmatpush.bf16.msra.mxu0 %v227
  %297 = vmatpush.bf16.msra.mxu0 %v226
  %298 = vmatmul.bf16.gmra.mxu0 %v90
  %v299 = vpop.f32.mrf.mxu0
  %v300 = vadd.f32 %v82, %v299
  %v301 = vpop.f32.mrf.mxu0
  %302 = vdwg.mxu0
  %303 = vmatpush.bf16.msra.mxu0 %v241
  %304 = vmatpush.bf16.msra.mxu0 %v240
  %305 = vmatpush.bf16.msra.mxu0 %v239
  %306 = vmatpush.bf16.msra.mxu0 %v238
  %307 = vmatpush.bf16.msra.mxu0 %v237
  %308 = vmatpush.bf16.msra.mxu0 %v236
  %309 = vmatpush.bf16.msra.mxu0 %v235
  %310 = vmatpush.bf16.msra.mxu0 %v234
  %311 = vmatmul.bf16.gmra.mxu0 %v91
  %v312 = vpop.f32.mrf.mxu0
  %v313 = vadd.f32 %v300, %v312
  %v314 = vpop.f32.mrf.mxu0
  %315 = vdwg.mxu0
  %316 = vmatpush.bf16.msra.mxu0 %v249
  %317 = vmatpush.bf16.msra.mxu0 %v248
  %318 = vmatpush.bf16.msra.mxu0 %v247
  %319 = vmatpush.bf16.msra.mxu0 %v246
  %320 = vmatpush.bf16.msra.mxu0 %v245
  %321 = vmatpush.bf16.msra.mxu0 %v244
  %322 = vmatpush.bf16.msra.mxu0 %v243
  %323 = vmatpush.bf16.msra.mxu0 %v242
  %324 = vmatmul.bf16.gmra.mxu0 %v92
  %v325 = vpop.f32.mrf.mxu0
  %v326 = vadd.f32 %v313, %v325
  %v327 = vpop.f32.mrf.mxu0
  %328 = vdwg.mxu0
  %329 = vmatpush.bf16.msra.mxu0 %v257
  %330 = vmatpush.bf16.msra.mxu0 %v256
  %331 = vmatpush.bf16.msra.mxu0 %v255
  %332 = vmatpush.bf16.msra.mxu0 %v254
  %333 = vmatpush.bf16.msra.mxu0 %v253
  %334 = vmatpush.bf16.msra.mxu0 %v252
  %335 = vmatpush.bf16.msra.mxu0 %v251
  %336 = vmatpush.bf16.msra.mxu0 %v250
  %337 = vmatmul.bf16.gmra.mxu0 %v93
  %v338 = vpop.f32.mrf.mxu0
  %v339 = vadd.f32 %v326, %v338
  %v340 = vpop.f32.mrf.mxu0
  %341 = vdwg.mxu0
  %342 = vst [vmem:[%s3] sm:$0xff] %v339
  // Predicated region
  $region14: #{linear_pallas.1} parent=0 // pred_check
    _
  $region15: #{linear_pallas.1} parent=0 // pred_check_branch
    %344 = sbr.rel (0) target = $region17
  $region16: #{linear_pallas.1} parent=0 // pred_region
    _
  $region17: #{linear_pallas.1} parent=0 // pred_fallthru
    _
  // Predicated region
  $region18: #{linear_pallas.1} parent=0 // pred_check
    _
  $region19: #{linear_pallas.1} parent=0 // pred_check_branch
    %346 = sbr.rel (0) target = $region21
  $region20: #{linear_pallas.1} parent=0 // pred_region
    _
  $region21: #{linear_pallas.1} parent=0 // pred_fallthru
    _

</llo_original>
